<compile_context>
chip_gen: v6e
topology: v6e:2x2x1
jax: 0.10.0
libtpu: 0.0.40
codegen_flags: <defaults>
</compile_context>

<pallas_src>
import jax
import jax.numpy as jnp
from jax.experimental import pallas as pl
from jax.experimental.pallas import tpu as pltpu


_LANE_WIDTHS = (1024, 512, 256, 128)   # prefer widest lane-dense slab (unmasked vst)
_TILE_ROWS_MAX = 256                   # 256 rows x 1024 lanes x 4B = 1 MiB f32 block
_VMEM_LIMIT_BYTES = 16 * 1024 * 1024   # 2 arrays x 2 buffers x <=1 MiB fits easily
                                       # (also within v5e's default scoped limit)


def _make_add_scalar_kernel(const):
    def kernel(x_ref, o_ref):
        # const is a trace-time Python scalar -> folded into a single VPU add.
        o_ref[...] = x_ref[...] + const
    return kernel


def add_scalar(x: jax.Array, scalar: float, alpha: float = 1.0) -> jax.Array:
    """y = x + alpha * scalar  (semantics of torch.add(x, scalar, alpha=alpha))."""
    const = scalar * alpha
    orig_shape = x.shape
    dtype = x.dtype
    n = x.size

    # Pad flat length up to a multiple of 128 lanes (at most 127 elements; for
    # typical NCHW sizes this is a no-op so no extra HBM copy is made).
    pad = (-n) % 128
    x_flat = jnp.reshape(x, (-1,))
    if pad:
        x_flat = jnp.pad(x_flat, (0, pad))
    n_padded = n + pad

    # Widest lane width that divides the padded length -> lane-dense, unmasked stores.
    width = next(w for w in _LANE_WIDTHS if n_padded % w == 0)
    rows = n_padded // width
    x2d = jnp.reshape(x_flat, (rows, width))

    # Row tile: ~1 MiB blocks; if the whole array is smaller, one full-extent block.
    tile_r = min(_TILE_ROWS_MAX, rows)
    grid = (pl.cdiv(rows, tile_r),)

    out2d = pl.pallas_call(
        _make_add_scalar_kernel(const),
        out_shape=jax.ShapeDtypeStruct((rows, width), dtype),
        grid=grid,
        in_specs=[pl.BlockSpec((tile_r, width), lambda i: (i, 0))],
        out_specs=pl.BlockSpec((tile_r, width), lambda i: (i, 0)),
        compiler_params=pltpu.CompilerParams(
            # Independent elementwise rows: parallel (enables 2-TC sharding on v7x).
            dimension_semantics=("parallel",),
            vmem_limit_bytes=_VMEM_LIMIT_BYTES,
        ),
    )(x2d)

    out_flat = jnp.reshape(out2d, (-1,))
    if pad:
        out_flat = out_flat[:n]
    return jnp.reshape(out_flat, orig_shape)


if __name__ == "__main__":
    key = jax.random.PRNGKey(0)
    x = jax.random.normal(key, (2, 4, 16, 16), dtype=jnp.float32)
    scalar = 1.0
    alpha = 1.0

    y = add_scalar(x, scalar, alpha)
    jax.block_until_ready(y)

    # correctness check against plain JAX reference
    y_ref = x + scalar * alpha
    assert y.shape == x.shape
    assert y.dtype == x.dtype
    assert jnp.allclose(y, y_ref, atol=1e-6, rtol=1e-6)

    print("KERNEL_OK")
</pallas_src>

<mosaic_0001>
module attributes {stable_mosaic.version = 11 : i64} {
  func.func @kernel(%arg0: i32, %arg1: memref<2x1024xf32, #tpu.memory_space<vmem>>, %arg2: memref<2x1024xf32, #tpu.memory_space<vmem>>) attributes {dimension_semantics = [#tpu.dimension_semantics<parallel>], iteration_bounds = array<i64: 1>, scalar_prefetch = 0 : i64, scratch_operands = 0 : i64, tpu.core_type = #tpu.core_type<tc>, window_params = [{transform_indices = @transform_0, window_bounds = array<i64: 2, 1024>}, {transform_indices = @transform_1, window_bounds = array<i64: 2, 1024>}]} {
    %c0 = arith.constant 0 : index
    %c0_0 = arith.constant 0 : index
    %0 = vector.load %arg1[%c0, %c0_0] : memref<2x1024xf32, #tpu.memory_space<vmem>>, vector<2x1024xf32>
    %cst = arith.constant 1.000000e+00 : f32
    %1 = vector.broadcast %cst : f32 to vector<2x1024xf32>
    %2 = arith.addf %0, %1 : vector<2x1024xf32>
    %c0_1 = arith.constant 0 : index
    %c0_2 = arith.constant 0 : index
    %3 = vector.load %arg2[%c0_1, %c0_2] : memref<2x1024xf32, #tpu.memory_space<vmem>>, vector<2x1024xf32>
    tpu.vector_store %arg2[%c0_1, %c0_2], %2 {strides = array<i32>} : memref<2x1024xf32, #tpu.memory_space<vmem>>, vector<2x1024xf32>,
    return
  }
  func.func @transform_0(%arg0: i32) -> (i32, i32) {
    %c0_i32 = arith.constant 0 : i32
    %c0_i32_0 = arith.constant 0 : i32
    return %arg0, %c0_i32 : i32, i32
  }
  func.func @transform_1(%arg0: i32) -> (i32, i32) {
    %c0_i32 = arith.constant 0 : i32
    %c0_i32_0 = arith.constant 0 : i32
    return %arg0, %c0_i32 : i32, i32
  }
}

</mosaic_0001>

<llo_original>
// kernel: tpu_custom_call.1
$region0: #{tpu_custom_call.1}
  #allocation0 [shape = 'u32[]', space=smem, size = 0x4, offset = 0x4, fixed_abs, tag = 'smem constant byte address 0x4 - core index']
  #allocation1 [shape = 'u32[144,128]{1,0:T(1,128)}', space=vmem, size = 0x12000, scoped, tag = 'internal scratch']
  %s0 = inlined_call_operand.hbm [shape: f32[2,1024], index: 0, kind: input, shape index: {}]
  %s1 = inlined_call_operand.hbm [shape: f32[2,1024], index: 1, kind: output, shape index: {}]
  %s2 = sld [smem:[#allocation0]]
  $region18: #{tpu_custom_call.1} parent=0
    _
  %s4 = ssub.s32 1, %s2
  %s5 = scalar_select 0, %s4, %s2
  $region1: #{tpu_custom_call.1} parent=0
    #allocation2 [shape = 'u8[8192]{0}', space=vmem, size = 0x2000, scoped, tag = 'input window, operand 0, single buffered']
    #allocation3 [shape = 's32[1]{0}', space=sflag, size = 0x4, scoped, tag = 'scoped memory for tpu_custom_call.1']
    #allocation4 [shape = 's32[1]{0}', space=sflag, size = 0x4, scoped, tag = 'scoped memory for tpu_custom_call.1']
    #allocation5 [shape = 'u8[8192]{0}', space=vmem, size = 0x2000, scoped, tag = 'output window, operand 0, single buffered']
    %6 = vsyncpa [#allocation3], 0
    %7 = vsyncpa [#allocation4], 0
    // Predicated region
    $region2: #{tpu_custom_call.1} parent=1 // pred_check
      _
    $region3: #{tpu_custom_call.1} parent=1 // pred_check_branch
      %9 = sbr.rel (0) target = $region5
    $region4: #{tpu_custom_call.1} parent=1 // pred_region
      %s11 = ssub.s32 256, 256
      %12 = vsyncadd [#allocation3], %s11
      %s14 = sshll.u32 [#allocation2], 4
      %s15 = int_to_ptr.vmem [resolvable:$true] %s14
      %17 = dma.hbm_to_vmem [thread:$0]  %s0, 256, %s15, [#allocation3]
    $region5: #{tpu_custom_call.1} parent=1 // pred_fallthru
      _
    // Predicated region
    $region6: #{tpu_custom_call.1} parent=1 // pred_check
      _
    $region7: #{tpu_custom_call.1} parent=1 // pred_check_branch
      %19 = sbr.rel (0) target = $region9
    $region8: #{tpu_custom_call.1} parent=1 // pred_region
      %20 = dma.done [#allocation3], 256
    $region9: #{tpu_custom_call.1} parent=1 // pred_fallthru
      _
    %v21 = vld [vmem:[#allocation2] sm:$0xff]
    %v22 = vld [vmem:[#allocation2 + $0x8] sm:$0xff]
    %v23 = vadd.f32 %v21, 1.0
    %v24 = vadd.f32 %v22, 1.0
    %25 = vst [vmem:[#allocation5] sm:$0xff] %v23
    %26 = vst [vmem:[#allocation5 + $0x8] sm:$0xff] %v24
    // Predicated region
    $region10: #{tpu_custom_call.1} parent=1 // pred_check
      _
    $region11: #{tpu_custom_call.1} parent=1 // pred_check_branch
      %28 = sbr.rel (0) target = $region13
    $region12: #{tpu_custom_call.1} parent=1 // pred_region
      %s30 = ssub.s32 256, 256
      %31 = vsyncadd [#allocation4], %s30
      %s33 = sshll.u32 [#allocation5], 4
      %s34 = int_to_ptr.vmem [resolvable:$true] %s33
      %36 = dma.vmem_to_hbm [thread:$0]  %s34, 256, %s1, [#allocation4]
    $region13: #{tpu_custom_call.1} parent=1 // pred_fallthru
      _
    // Predicated region
    $region14: #{tpu_custom_call.1} parent=1 // pred_check
      _
    $region15: #{tpu_custom_call.1} parent=1 // pred_check_branch
      %38 = sbr.rel (0) target = $region17
    $region16: #{tpu_custom_call.1} parent=1 // pred_region
      %39 = dma.done [#allocation4], 256
    $region17: #{tpu_custom_call.1} parent=1 // pred_fallthru
      _
    %40 = vsyncpa [#allocation3], 1
    %41 = vsyncpa [#allocation4], 1

</llo_original>
